<compile_context>
chip_gen: v6e
topology: v6e:2x2x1
jax: 0.10.0
libtpu: 0.0.40
codegen_flags: <defaults>
</compile_context>

<pallas_src>
import functools

import numpy as np
import jax
import jax.numpy as jnp
from jax import lax
from jax.experimental import pallas as pl
from jax.experimental.pallas import tpu as pltpu

LANE = 128     # lane width: padded feature / hidden / class dims
TM_AGG = 128   # destination-row tile for the fused aggregation kernel
SUB = 128      # row sub-chunk inside the head linear kernel
UNROLL = 8     # per-row degree padded to a multiple of this (gather unroll)


def _round_up(x, m):
    return (x + m - 1) // m * m


def _vmem_limit_bytes():
    """Generation-aware VMEM limit: ~75% of physical (48 MiB v7x, 96 MiB v5e/v6e)."""
    try:
        cap = int(getattr(pltpu.get_tpu_info(), "vmem_capacity_bytes", 0))
    except Exception:
        cap = 0
    if cap <= 0:
        return 48 * 1024 * 1024          # conservative fallback, valid on every gen
    return min(int(cap * 3 // 4), 112 * 1024 * 1024)


# ---------------------------------------------------------------------------
# Kernel 1: head linear  y = x @ W + b   (bf16 MXU operands, f32 epilogue,
# 128-row sub-chunks inside a larger grid tile, pad rows zeroed)
# ---------------------------------------------------------------------------
def _linear_kernel(x_ref, w_ref, b_ref, o_ref, *, num_nodes):
    tm, _ = x_ref.shape
    i = pl.program_id(0)
    w = w_ref[...]                       # (k, d_out) bf16, resident
    b = b_ref[...]                       # (1, d_out) f32
    for c in range(tm // SUB):           # static: amortizes grid-step overhead
        r0 = c * SUB
        xs = x_ref[pl.ds(r0, SUB), :].astype(jnp.bfloat16)
        y = jnp.dot(xs, w, preferred_element_type=jnp.float32) + b
        # Zero padded rows: they are the target of padding edges downstream.
        rows = i * tm + r0 + lax.broadcasted_iota(jnp.int32, (SUB, 1), 0)
        y = jnp.where(rows < num_nodes, y, 0.0)
        o_ref[pl.ds(r0, SUB), :] = y


def _pallas_linear(x, w_bf16, b, *, num_nodes, tm):
    n_pad, k = x.shape
    d_out = w_bf16.shape[1]
    b2 = b.reshape(1, d_out)
    kernel = functools.partial(_linear_kernel, num_nodes=num_nodes)
    return pl.pallas_call(
        kernel,
        out_shape=jax.ShapeDtypeStruct((n_pad, d_out), jnp.float32),
        grid=(n_pad // tm,),
        in_specs=[
            pl.BlockSpec((tm, k), lambda i: (i, 0)),       # row tile of x
            pl.BlockSpec((k, d_out), lambda i: (0, 0)),    # W resident
            pl.BlockSpec((1, d_out), lambda i: (0, 0)),    # bias resident
        ],
        out_specs=pl.BlockSpec((tm, d_out), lambda i: (i, 0)),
        compiler_params=pltpu.CompilerParams(
            dimension_semantics=("parallel",),
            vmem_limit_bytes=_vmem_limit_bytes()),
    )(x, w_bf16, b2)


# ---------------------------------------------------------------------------
# Kernel 2: fused CSR aggregation (+relu) followed by the next linear layer.
#   agg[r] = relu( sum_{e in padded CSR row r} x[edge[e]] )
#   out    = agg @ W + b                       (hidden layer, pad rows zeroed)
#   out    = log_softmax(relu(agg @ W + b))    (tail layer, padded class lanes
#                                               masked out of the softmax)
# The gather is vectorized (8 independent chains per 8-edge chunk), results are
# batched into (8,128) chunks, and the per-group matmul is skewed one group
# behind the gather so MXU work overlaps scalar/vld work.
# ---------------------------------------------------------------------------
def _agg_linear_kernel(node_ptr_ref, edge_ref,          # scalar prefetch (SMEM)
                       x_ref, w_ref, b_ref,             # VMEM inputs
                       o_ref,                           # VMEM output tile
                       *, tm, tail, n_class, num_nodes):
    d = x_ref.shape[1]
    d_out = o_ref.shape[1]
    row0 = pl.program_id(0) * tm
    n_groups = tm // 8
    b = b_ref[...]                                      # (1, d_out) f32

    def gather_group(g):
        """relu(neighbor-sum) for the 8 destination rows of group g -> (8, d) f32."""
        rows = []
        for rr in range(8):                             # static unroll over dest rows
            node = row0 + g * 8 + rr
            start = node_ptr_ref[node]
            n_chunks = (node_ptr_ref[node + 1] - start) // UNROLL

            def chunk_body(c, accs):
                base = start + c * UNROLL
                # 8 independent gather chains per chunk (hides vld latency).
                return tuple(
                    accs[j] + x_ref[pl.ds(edge_ref[base + j], 1), :]
                    for j in range(UNROLL))

            accs = lax.fori_loop(
                0, n_chunks, chunk_body,
                tuple(jnp.zeros((1, d), jnp.float32) for _ in range(UNROLL)))
            s = ((accs[0] + accs[1]) + (accs[2] + accs[3])) \
                + ((accs[4] + accs[5]) + (accs[6] + accs[7]))
            rows.append(s)
        # Assemble a full (8,128) chunk: one vreg-wide value, one wide store later.
        return jnp.maximum(jnp.concatenate(rows, axis=0), 0.0)   # fused relu

    def emit(g, agg8):
        """Linear + epilogue for group g (overlaps with the next group's gather)."""
        y = jnp.dot(agg8.astype(jnp.bfloat16), w_ref[...],
                    preferred_element_type=jnp.float32) + b
        off = g * 8
        if not isinstance(off, int):
            off = pl.multiple_of(off, 8)
        if tail:
            y = jnp.maximum(y, 0.0)
            cols = lax.broadcasted_iota(jnp.int32, (8, d_out), 1)
            y = jnp.where(cols < n_class, y, -1e30)
            m = jnp.max(y, axis=-1, keepdims=True)
            lse = m + jnp.log(jnp.sum(jnp.exp(y - m), axis=-1, keepdims=True))
            y = y - lse
        else:
            # Keep padded rows exactly zero: they feed padding edges next layer.
            rows = row0 + g * 8 + lax.broadcasted_iota(jnp.int32, (8, 1), 0)
            y = jnp.where(rows < num_nodes, y, 0.0)
        o_ref[pl.ds(off, 8), :] = y

    # Skewed (software-pipelined) loop: group g-1's matmul/epilogue sits in the
    # same basic block as group g's gather -> MXU pushes hide behind scalar/vld.
    def group_body(g, prev_agg):
        emit(g - 1, prev_agg)
        return gather_group(g)

    last = lax.fori_loop(1, n_groups, group_body, gather_group(0))
    emit(n_groups - 1, last)


def _pallas_aggregate_then_linear(node_ptr, edge_list, x, w_bf16, b, *,
                                  tail, n_class, num_nodes, tm=TM_AGG):
    n_pad, d = x.shape
    d_out = w_bf16.shape[1]
    b2 = b.reshape(1, d_out)
    kernel = functools.partial(_agg_linear_kernel, tm=tm, tail=tail,
                               n_class=n_class, num_nodes=num_nodes)
    grid_spec = pltpu.PrefetchScalarGridSpec(
        num_scalar_prefetch=2,            # padded nodePointer, padded edgeList -> SMEM
        grid=(n_pad // tm,),
        in_specs=[
            pl.BlockSpec((n_pad, d), lambda i, *_: (0, 0)),    # x resident (f32)
            pl.BlockSpec((d, d_out), lambda i, *_: (0, 0)),    # W resident (bf16)
            pl.BlockSpec((1, d_out), lambda i, *_: (0, 0)),    # bias resident (f32)
        ],
        out_specs=pl.BlockSpec((tm, d_out), lambda i, *_: (i, 0)),
    )
    return pl.pallas_call(
        kernel,
        out_shape=jax.ShapeDtypeStruct((n_pad, d_out), jnp.float32),
        grid_spec=grid_spec,
        compiler_params=pltpu.CompilerParams(
            dimension_semantics=("parallel",),
            vmem_limit_bytes=_vmem_limit_bytes()),
    )(node_ptr, edge_list, x, w_bf16, b2)


# ---------------------------------------------------------------------------
# Host-side CSR preprocessing: per-row degree padded to a multiple of UNROLL,
# padding edges point at `zero_row` (a row that the kernels keep at zero),
# padded destination rows get degree 0.
# ---------------------------------------------------------------------------
def pad_csr_for_kernel(node_pointer, edge_list, num_nodes, n_pad, zero_row,
                       unroll=UNROLL):
    ptr = np.asarray(node_pointer, dtype=np.int64)
    el = np.asarray(edge_list, dtype=np.int64)
    deg = np.diff(ptr[:num_nodes + 1])
    deg_pad = ((deg + unroll - 1) // unroll) * unroll
    new_ptr = np.zeros(n_pad + 1, dtype=np.int64)
    new_ptr[1:num_nodes + 1] = np.cumsum(deg_pad)
    new_ptr[num_nodes + 1:] = new_ptr[num_nodes]          # padded rows: degree 0
    e_pad = int(new_ptr[num_nodes])
    new_edges = np.full(max(e_pad, unroll), zero_row, dtype=np.int32)
    if el.size:
        within = np.arange(el.size) - np.repeat(ptr[:num_nodes], deg)
        new_edges[np.repeat(new_ptr[:num_nodes], deg) + within] = el
    return (jnp.asarray(new_ptr.astype(np.int32)), jnp.asarray(new_edges))


# ---------------------------------------------------------------------------
# GCN forward (mirrors the PyTorch module)
#   head -> [agg+relu ; hidden] x (L-1) -> agg+relu ; tail ; relu ; log_softmax
# ---------------------------------------------------------------------------
def gcn_forward(params, node_pointer, edge_list, embed, *,
                num_nodes, n_class, n_hidden_layers=1):
    # +1 guarantees a spare, kernel-zeroed row (index num_nodes) that padding
    # edges can safely point at.
    n_pad = _round_up(num_nodes + 1, TM_AGG)
    k_pad = params["w_head"].shape[0]

    embed = jnp.asarray(embed, jnp.float32)
    embed_p = jnp.zeros((n_pad, k_pad), jnp.float32)
    embed_p = embed_p.at[:num_nodes, :embed.shape[1]].set(embed[:num_nodes])

    node_ptr_p, edge_p = pad_csr_for_kernel(
        node_pointer, edge_list, num_nodes, n_pad, zero_row=num_nodes)

    head_tm = max(t for t in (512, 256, 128) if n_pad % t == 0)
    x = _pallas_linear(embed_p, params["w_head"], params["b_head"],
                       num_nodes=num_nodes, tm=head_tm)
    for _ in range(n_hidden_layers - 1):
        x = _pallas_aggregate_then_linear(
            node_ptr_p, edge_p, x, params["w_hidden"], params["b_hidden"],
            tail=False, n_class=0, num_nodes=num_nodes)
    out = _pallas_aggregate_then_linear(
        node_ptr_p, edge_p, x, params["w_tail"], params["b_tail"],
        tail=True, n_class=n_class, num_nodes=num_nodes)
    return out[:num_nodes, :n_class]


# ---------------------------------------------------------------------------
# Parameter construction (PyTorch Linear (out,in) -> transposed, lane-padded,
# bf16 weights for the MXU, f32 biases)
# ---------------------------------------------------------------------------
def make_params(key, n_feature, n_hidden, n_class, scale=0.1):
    k_wh, k_bh, k_wm, k_bm, k_wt, k_bt = jax.random.split(key, 6)
    f_pad = _round_up(n_feature, LANE)
    h_pad = _round_up(n_hidden, LANE)
    c_pad = _round_up(n_class, LANE)

    w_head = scale * jax.random.normal(k_wh, (n_hidden, n_feature), dtype=jnp.float32)
    b_head = scale * jax.random.normal(k_bh, (n_hidden,), dtype=jnp.float32)
    w_hid = scale * jax.random.normal(k_wm, (n_hidden, n_hidden), dtype=jnp.float32)
    b_hid = scale * jax.random.normal(k_bm, (n_hidden,), dtype=jnp.float32)
    w_tail = scale * jax.random.normal(k_wt, (n_class, n_hidden), dtype=jnp.float32)
    b_tail = scale * jax.random.normal(k_bt, (n_class,), dtype=jnp.float32)

    def pad2(w, r, c):
        return jnp.pad(w, ((0, r - w.shape[0]), (0, c - w.shape[1])))

    params = {
        "w_head": pad2(w_head.T, f_pad, h_pad).astype(jnp.bfloat16),
        "b_head": jnp.pad(b_head, (0, h_pad - n_hidden)).astype(jnp.float32),
        "w_hidden": pad2(w_hid.T, h_pad, h_pad).astype(jnp.bfloat16),
        "b_hidden": jnp.pad(b_hid, (0, h_pad - n_hidden)).astype(jnp.float32),
        "w_tail": pad2(w_tail.T, h_pad, c_pad).astype(jnp.bfloat16),
        "b_tail": jnp.pad(b_tail, (0, c_pad - n_class)).astype(jnp.float32),
    }
    raw = dict(w_head=w_head, b_head=b_head, w_hidden=w_hid, b_hidden=b_hid,
               w_tail=w_tail, b_tail=b_tail)
    return params, raw


# ---------------------------------------------------------------------------
# Pure-JAX reference (for the correctness check)
# ---------------------------------------------------------------------------
def gcn_reference(raw, node_pointer, edge_list, embed, num_nodes,
                  n_hidden_layers=1):
    np_ptr = np.asarray(node_pointer)
    np_edges = np.asarray(edge_list)
    seg_ids = jnp.asarray(np.repeat(np.arange(num_nodes), np.diff(np_ptr)))

    def aggregate(x):
        return jax.ops.segment_sum(x[np_edges], seg_ids, num_segments=num_nodes)

    with jax.default_matmul_precision("highest"):
        x = embed @ raw["w_head"].T + raw["b_head"]
        x = jax.nn.relu(aggregate(x))
        for _ in range(n_hidden_layers - 1):
            x = x @ raw["w_hidden"].T + raw["b_hidden"]
            x = jax.nn.relu(aggregate(x))
        x = x @ raw["w_tail"].T + raw["b_tail"]
        x = jax.nn.relu(x)
        return jax.nn.log_softmax(x, axis=-1)


if __name__ == "__main__":
    # ---- small deterministic problem --------------------------------------
    num_nodes = 16
    n_feature = 32
    n_hidden = 32
    n_class = 8
    n_hidden_layers = 2            # exercises both fused (hidden + tail) paths
    num_groups = 4                 # GNNAdvisor scheduling metadata only
    ebd_dim = n_feature            # scheduling metadata only

    key = jax.random.PRNGKey(0)
    k_embed, k_params = jax.random.split(key)

    embed = jax.random.normal(k_embed, (num_nodes, n_feature), dtype=jnp.float32)

    # deterministic CSR graph: each node i -> {i, (i+1)%N, (i+3)%N}
    node_pointer = np.arange(0, 3 * (num_nodes + 1), 3,
                             dtype=np.int32)[: num_nodes + 1]
    edge_list = np.concatenate(
        [np.array([i, (i + 1) % num_nodes, (i + 3) % num_nodes], dtype=np.int32)
         for i in range(num_nodes)])
    group_node_pointer = np.linspace(0, num_nodes, num_groups + 1,
                                     dtype=np.int32)  # unused in the math

    params, raw = make_params(k_params, n_feature, n_hidden, n_class)

    out = gcn_forward(params, node_pointer, edge_list, embed,
                      num_nodes=num_nodes, n_class=n_class,
                      n_hidden_layers=n_hidden_layers)
    out = jax.block_until_ready(out)

    # sanity: shape + log_softmax rows sum (in prob space) to ~1
    assert out.shape == (num_nodes, n_class)
    row_prob_sums = jnp.sum(jnp.exp(out), axis=-1)
    assert bool(jnp.all(jnp.abs(row_prob_sums - 1.0) < 1e-4))

    # compare against a pure-JAX reference (bf16 MXU operands vs f32-highest
    # reference -> loose-ish tolerance)
    ref = gcn_reference(raw, node_pointer, edge_list, embed, num_nodes,
                        n_hidden_layers=n_hidden_layers)
    assert bool(jnp.all(jnp.abs(out - ref) < 6e-2)), \
        float(jnp.max(jnp.abs(out - ref)))

    print("KERNEL_OK")
</pallas_src>

<mosaic_0001>
module attributes {stable_mosaic.version = 11 : i64} {
  func.func @_linear_kernel(%arg0: i32, %arg1: memref<128x128xf32, #tpu.memory_space<vmem>>, %arg2: memref<128x128xbf16, #tpu.memory_space<vmem>>, %arg3: memref<1x128xf32, #tpu.memory_space<vmem>>, %arg4: memref<128x128xf32, #tpu.memory_space<vmem>>) attributes {dimension_semantics = [#tpu.dimension_semantics<parallel>], iteration_bounds = array<i64: 1>, scalar_prefetch = 0 : i64, scratch_operands = 0 : i64, tpu.core_type = #tpu.core_type<tc>, window_params = [{transform_indices = @transform_0, window_bounds = array<i64: 128, 128>}, {pipeline_mode = #tpu.pipeline_mode<synchronous>, transform_indices = @transform_1, window_bounds = array<i64: 128, 128>}, {pipeline_mode = #tpu.pipeline_mode<synchronous>, transform_indices = @transform_2, window_bounds = array<i64: 1, 128>}, {transform_indices = @transform_3, window_bounds = array<i64: 128, 128>}]} {
    %c0 = arith.constant 0 : index
    %c0_0 = arith.constant 0 : index
    %0 = vector.load %arg2[%c0, %c0_0] : memref<128x128xbf16, #tpu.memory_space<vmem>>, vector<128x128xbf16>
    %c0_1 = arith.constant 0 : index
    %c0_2 = arith.constant 0 : index
    %1 = vector.load %arg3[%c0_1, %c0_2] : memref<1x128xf32, #tpu.memory_space<vmem>>, vector<1x128xf32>
    %c0_3 = arith.constant 0 : index
    %c0_4 = arith.constant 0 : index
    %2 = vector.load %arg1[%c0_3, %c0_4] : memref<128x128xf32, #tpu.memory_space<vmem>>, vector<128x128xf32>
    %3 = arith.truncf %2 : vector<128x128xf32> to vector<128x128xbf16>
    %cst = arith.constant dense<0.000000e+00> : vector<128x128xf32>
    %4 = tpu.matmul %3, %0, %cst {dimension_numbers = #tpu.dot_dimension_numbers<[1], [0], [0], [1], [0, 0, 1, 1], [], []>} : vector<128x128xbf16>, vector<128x128xbf16>, vector<128x128xf32> -> vector<128x128xf32>
    %5 = vector.broadcast %1 : vector<1x128xf32> to vector<128x128xf32>
    %6 = arith.addf %4, %5 : vector<128x128xf32>
    %c128_i32 = arith.constant 128 : i32
    %7 = arith.muli %arg0, %c128_i32 : i32
    %c0_i32 = arith.constant 0 : i32
    %8 = arith.addi %7, %c0_i32 : i32
    %9 = tpu.iota {dimensions = array<i32: 0>} : vector<128x1xi32>
    %10 = vector.broadcast %8 : i32 to vector<128x1xi32>
    %11 = arith.addi %10, %9 : vector<128x1xi32>
    %c16_i32 = arith.constant 16 : i32
    %12 = vector.broadcast %c16_i32 : i32 to vector<128x1xi32>
    %13 = arith.cmpi slt, %11, %12 : vector<128x1xi32>
    %cst_5 = arith.constant 0.000000e+00 : f32
    %14 = vector.shape_cast %13 : vector<128x1xi1> to vector<128x1xi1>
    %15 = vector.broadcast %14 : vector<128x1xi1> to vector<128x128xi1>
    %16 = vector.broadcast %cst_5 : f32 to vector<128x128xf32>
    %17 = arith.select %15, %6, %16 : vector<128x128xi1>, vector<128x128xf32>
    %c0_6 = arith.constant 0 : index
    %c0_7 = arith.constant 0 : index
    %18 = vector.load %arg4[%c0_6, %c0_7] : memref<128x128xf32, #tpu.memory_space<vmem>>, vector<128x128xf32>
    tpu.vector_store %arg4[%c0_6, %c0_7], %17 {strides = array<i32>} : memref<128x128xf32, #tpu.memory_space<vmem>>, vector<128x128xf32>,
    return
  }
  func.func @transform_0(%arg0: i32) -> (i32, i32) {
    %c0_i32 = arith.constant 0 : i32
    %c0_i32_0 = arith.constant 0 : i32
    return %arg0, %c0_i32 : i32, i32
  }
  func.func @transform_1(%arg0: i32) -> (i32, i32) {
    %c0_i32 = arith.constant 0 : i32
    %c0_i32_0 = arith.constant 0 : i32
    %c0_i32_1 = arith.constant 0 : i32
    return %c0_i32, %c0_i32_0 : i32, i32
  }
  func.func @transform_2(%arg0: i32) -> (i32, i32) {
    %c0_i32 = arith.constant 0 : i32
    %c0_i32_0 = arith.constant 0 : i32
    %c0_i32_1 = arith.constant 0 : i32
    return %c0_i32, %c0_i32_0 : i32, i32
  }
  func.func @transform_3(%arg0: i32) -> (i32, i32) {
    %c0_i32 = arith.constant 0 : i32
    %c0_i32_0 = arith.constant 0 : i32
    return %arg0, %c0_i32 : i32, i32
  }
}

</mosaic_0001>

<llo_original>
// kernel: tpu_custom_call.1
$region0: #{tpu_custom_call.1}
  #allocation0 [shape = 'u32[]', space=smem, size = 0x4, offset = 0x4, fixed_abs, tag = 'smem constant byte address 0x4 - core index']
  #allocation1 [shape = 'u32[144,128]{1,0:T(1,128)}', space=vmem, size = 0x12000, scoped, tag = 'internal scratch']
  %s0 = inlined_call_operand.hbm [shape: f32[128,128], index: 0, kind: input, shape index: {}]
  %s1 = inlined_call_operand.hbm [shape: bf16[128,128], index: 1, kind: input, shape index: {}]
  %s2 = inlined_call_operand.vmem [shape: f32[1,128], index: 2, kind: input, shape index: {}]
  %s3 = inlined_call_operand.hbm [shape: f32[128,128], index: 3, kind: output, shape index: {}]
  %s4 = sld [smem:[#allocation0]]
  $region30: #{tpu_custom_call.1} parent=0
    _
  %s6 = ssub.s32 1, %s4
  %s7 = scalar_select 0, %s6, %s4
  $region1: #{tpu_custom_call.1} parent=0
    #allocation2 [shape = 'u8[65536]{0}', space=vmem, size = 0x10000, scoped, tag = 'input window, operand 0, single buffered']
    #allocation3 [shape = 's32[1]{0}', space=sflag, size = 0x4, scoped, tag = 'scoped memory for tpu_custom_call.1']
    #allocation4 [shape = 's32[1]{0}', space=sflag, size = 0x4, scoped, tag = 'scoped memory for tpu_custom_call.1']
    #allocation5 [shape = 'u8[32768]{0}', space=vmem, size = 0x8000, scoped, tag = 'input window, operand 1, single buffered']
    #allocation6 [shape = 's32[1]{0}', space=sflag, size = 0x4, scoped, tag = 'scoped memory for tpu_custom_call.1']
    #allocation7 [shape = 'u8[65536]{0}', space=vmem, size = 0x10000, scoped, tag = 'output window, operand 0, single buffered']
    %8 = vsyncpa [#allocation3], 0
    %9 = vsyncpa [#allocation6], 0
    %10 = vsyncpa [#allocation4], 0
    // Predicated region
    $region2: #{tpu_custom_call.1} parent=1 // pred_check
      _
    $region3: #{tpu_custom_call.1} parent=1 // pred_check_branch
      %12 = sbr.rel (0) target = $region5
    $region4: #{tpu_custom_call.1} parent=1 // pred_region
      %s14 = ssub.s32 2048, 2048
      %15 = vsyncadd [#allocation3], %s14
      %s16 = sshll.u32 [#allocation2], 4
      %s17 = int_to_ptr.vmem [resolvable:$true] %s16
      %22 = dma.hbm_to_vmem [thread:$0]  %s0, 2048, %s17, [#allocation3], 128, 128, 8
    $region5: #{tpu_custom_call.1} parent=1 // pred_fallthru
      _
    // Predicated region
    $region6: #{tpu_custom_call.1} parent=1 // pred_check
      _
    $region7: #{tpu_custom_call.1} parent=1 // pred_check_branch
      %24 = sbr.rel (0) target = $region9
    $region8: #{tpu_custom_call.1} parent=1 // pred_region
      %s26 = ssub.s32 1024, 1024
      %27 = vsyncadd [#allocation6], %s26
      %s28 = sshll.u32 [#allocation5], 4
      %s29 = int_to_ptr.vmem [resolvable:$true] %s28
      %34 = dma.hbm_to_vmem [thread:$0]  %s1, 1024, %s29, [#allocation6], 64, 64, 4
    $region9: #{tpu_custom_call.1} parent=1 // pred_fallthru
      _
    // Predicated region
    $region10: #{tpu_custom_call.1} parent=1 // pred_check
      _
    $region11: #{tpu_custom_call.1} parent=1 // pred_check_branch
      %36 = sbr.rel (0) target = $region13
    $region12: #{tpu_custom_call.1} parent=1 // pred_region
      _
    $region13: #{tpu_custom_call.1} parent=1 // pred_fallthru
      _
    // Predicated region
    $region14: #{tpu_custom_call.1} parent=1 // pred_check
      _
    $region15: #{tpu_custom_call.1} parent=1 // pred_check_branch
      %38 = sbr.rel (0) target = $region17
    $region16: #{tpu_custom_call.1} parent=1 // pred_region
      %39 = dma.done [#allocation3], 2048
    $region17: #{tpu_custom_call.1} parent=1 // pred_fallthru
      _
    // Predicated region
    $region18: #{tpu_custom_call.1} parent=1 // pred_check
      _
    $region19: #{tpu_custom_call.1} parent=1 // pred_check_branch
      %41 = sbr.rel (0) target = $region21
    $region20: #{tpu_custom_call.1} parent=1 // pred_region
      %42 = dma.done [#allocation6], 1024
    $region21: #{tpu_custom_call.1} parent=1 // pred_fallthru
      _
    %v44 = vld [vmem:[#allocation5] sm:$0xf]
    %v45 = vld [vmem:[#allocation5 + $0x4] sm:$0xf]
    %v46 = vld [vmem:[#allocation5 + $0x8] sm:$0xf]
    %v47 = vld [vmem:[#allocation5 + $0xc] sm:$0xf]
    %v48 = vld [vmem:[#allocation5 + $0x10] sm:$0xf]
    %v49 = vld [vmem:[#allocation5 + $0x14] sm:$0xf]
    %v50 = vld [vmem:[#allocation5 + $0x18] sm:$0xf]
    %v51 = vld [vmem:[#allocation5 + $0x1c] sm:$0xf]
    %v52 = vld [vmem:[#allocation5 + $0x20] sm:$0xf]
    %v53 = vld [vmem:[#allocation5 + $0x24] sm:$0xf]
    %v54 = vld [vmem:[#allocation5 + $0x28] sm:$0xf]
    %v55 = vld [vmem:[#allocation5 + $0x2c] sm:$0xf]
    %v56 = vld [vmem:[#allocation5 + $0x30] sm:$0xf]
    %v57 = vld [vmem:[#allocation5 + $0x34] sm:$0xf]
    %v58 = vld [vmem:[#allocation5 + $0x38] sm:$0xf]
    %v59 = vld [vmem:[#allocation5 + $0x3c] sm:$0xf]
    %v60 = vld [vmem:[%s2] sm:$0x1]
    %v61 = vld [vmem:[#allocation2] sm:$0xff]
    %v62 = vld [vmem:[#allocation2 + $0x8] sm:$0xff]
    %v63 = vld [vmem:[#allocation2 + $0x10] sm:$0xff]
    %v64 = vld [vmem:[#allocation2 + $0x18] sm:$0xff]
    %v65 = vld [vmem:[#allocation2 + $0x20] sm:$0xff]
    %v66 = vld [vmem:[#allocation2 + $0x28] sm:$0xff]
    %v67 = vld [vmem:[#allocation2 + $0x30] sm:$0xff]
    %v68 = vld [vmem:[#allocation2 + $0x38] sm:$0xff]
    %v69 = vld [vmem:[#allocation2 + $0x40] sm:$0xff]
    %v70 = vld [vmem:[#allocation2 + $0x48] sm:$0xff]
    %v71 = vld [vmem:[#allocation2 + $0x50] sm:$0xff]
    %v72 = vld [vmem:[#allocation2 + $0x58] sm:$0xff]
    %v73 = vld [vmem:[#allocation2 + $0x60] sm:$0xff]
    %v74 = vld [vmem:[#allocation2 + $0x68] sm:$0xff]
    %v75 = vld [vmem:[#allocation2 + $0x70] sm:$0xff]
    %v76 = vld [vmem:[#allocation2 + $0x78] sm:$0xff]
    %v77 = vpack.c.bf16 %v62, %v61
    %v78 = vpack.c.bf16 %v64, %v63
    %v79 = vpack.c.bf16 %v66, %v65
    %v80 = vpack.c.bf16 %v68, %v67
    %v81 = vpack.c.bf16 %v70, %v69
    %v82 = vpack.c.bf16 %v72, %v71
    %v83 = vpack.c.bf16 %v74, %v73
    %v84 = vpack.c.bf16 %v76, %v75
    %v86 = vlaneseq
    %v87 = vshrl.u32 %v86, 7
    %v88 = vsub.s32 0, %v87
    %v89 = vrot.slane %v60, %v88
    %v107 = vunpack.c.l.b16 %v44
    %v108 = vunpack.c.l.b16 %v45
    %v109 = vunpack.c.l.b16 %v46
    %v110 = vunpack.c.l.b16 %v47
    %v111 = vunpack.c.l.b16 %v48
    %v112 = vunpack.c.l.b16 %v49
    %v113 = vunpack.c.l.b16 %v50
    %v114 = vunpack.c.l.b16 %v51
    %v115 = vunpack.c.l.b16 %v52
    %v116 = vunpack.c.l.b16 %v53
    %v117 = vunpack.c.l.b16 %v54
    %v118 = vunpack.c.l.b16 %v55
    %v119 = vunpack.c.l.b16 %v56
    %v120 = vunpack.c.l.b16 %v57
    %v121 = vunpack.c.l.b16 %v58
    %v122 = vunpack.c.l.b16 %v59
    %v123 = vpack.c.b16 %v108, %v107
    %v124 = vpack.c.b16 %v110, %v109
    %v125 = vpack.c.b16 %v112, %v111
    %v126 = vpack.c.b16 %v114, %v113
    %v127 = vpack.c.b16 %v116, %v115
    %v128 = vpack.c.b16 %v118, %v117
    %v129 = vpack.c.b16 %v120, %v119
    %v130 = vpack.c.b16 %v122, %v121
    %139 = vmatprep.subr.bf16.mxu0 0
    %140 = vmatpush1.bf16.msra.mxu0 %v130
    %141 = vmatprep.subr.bf16.mxu0 0
    %142 = vmatpush1.bf16.msra.mxu0 %v129
    %143 = vmatprep.subr.bf16.mxu0 0
    %144 = vmatpush1.bf16.msra.mxu0 %v128
    %145 = vmatprep.subr.bf16.mxu0 0
    %146 = vmatpush1.bf16.msra.mxu0 %v127
    %147 = vmatprep.subr.bf16.mxu0 0
    %148 = vmatpush1.bf16.msra.mxu0 %v126
    %149 = vmatprep.subr.bf16.mxu0 0
    %150 = vmatpush1.bf16.msra.mxu0 %v125
    %151 = vmatprep.subr.bf16.mxu0 0
    %152 = vmatpush1.bf16.msra.mxu0 %v124
    %153 = vmatprep.subr.bf16.mxu0 0
    %154 = vmatpush1.bf16.msra.mxu0 %v123
    %155 = vmatprep.subr.bf16.mxu0 0
    %156 = vmatpush2.bf16.msra.mxu0 0
    %157 = vmatprep.subr.bf16.mxu0 0
    %158 = vmatpush2.bf16.msra.mxu0 0
    %159 = vmatprep.subr.bf16.mxu0 0
    %160 = vmatpush2.bf16.msra.mxu0 0
    %161 = vmatprep.subr.bf16.mxu0 0
    %162 = vmatpush2.bf16.msra.mxu0 0
    %163 = vmatprep.subr.bf16.mxu0 0
    %164 = vmatpush2.bf16.msra.mxu0 0
    %165 = vmatprep.subr.bf16.mxu0 0
    %166 = vmatpush2.bf16.msra.mxu0 0
    %167 = vmatprep.subr.bf16.mxu0 0
    %168 = vmatpush2.bf16.msra.mxu0 0
    %169 = vmatprep.subr.bf16.mxu0 0
    %170 = vmatpush2.bf16.msra.mxu0 0
    %171 = vmatprep.mubr.bf16.mxu0 0
    %172 = vmatmul.mubr.bf16.gmra.mxu0 %v77
    %v173 = vpop.f32.mrf.mxu0
    %v174 = vadd.f32 %v89, %v173
    %v175 = vpop.f32.mrf.mxu0
    %v176 = vpop.f32.mrf.mxu0
    %v177 = vadd.f32 %v89, %v176
    %v178 = vpop.f32.mrf.mxu0
    %179 = vmatprep.mubr.bf16.mxu0 0
    %180 = vmatmul.mubr.bf16.gmra.mxu0 %v78
    %v181 = vpop.f32.mrf.mxu0
    %v182 = vadd.f32 %v89, %v181
    %v183 = vpop.f32.mrf.mxu0
    %v184 = vpop.f32.mrf.mxu0
    %v185 = vadd.f32 %v89, %v184
    %v186 = vpop.f32.mrf.mxu0
    %187 = vmatprep.mubr.bf16.mxu0 0
    %188 = vmatmul.mubr.bf16.gmra.mxu0 %v79
    %v189 = vpop.f32.mrf.mxu0
    %v190 = vadd.f32 %v89, %v189
    %v191 = vpop.f32.mrf.mxu0
    %v192 = vpop.f32.mrf.mxu0
    %v193 = vadd.f32 %v89, %v192
    %v194 = vpop.f32.mrf.mxu0
    %195 = vmatprep.mubr.bf16.mxu0 0
    %196 = vmatmul.mubr.bf16.gmra.mxu0 %v80
    %v197 = vpop.f32.mrf.mxu0
    %v198 = vadd.f32 %v89, %v197
    %v199 = vpop.f32.mrf.mxu0
    %v200 = vpop.f32.mrf.mxu0
    %v201 = vadd.f32 %v89, %v200
    %v202 = vpop.f32.mrf.mxu0
    %203 = vmatprep.mubr.bf16.mxu0 0
    %204 = vmatmul.mubr.bf16.gmra.mxu0 %v81
    %v205 = vpop.f32.mrf.mxu0
    %v206 = vadd.f32 %v89, %v205
    %v207 = vpop.f32.mrf.mxu0
    %v208 = vpop.f32.mrf.mxu0
    %v209 = vadd.f32 %v89, %v208
    %v210 = vpop.f32.mrf.mxu0
    %211 = vmatprep.mubr.bf16.mxu0 0
    %212 = vmatmul.mubr.bf16.gmra.mxu0 %v82
    %v213 = vpop.f32.mrf.mxu0
    %v214 = vadd.f32 %v89, %v213
    %v215 = vpop.f32.mrf.mxu0
    %v216 = vpop.f32.mrf.mxu0
    %v217 = vadd.f32 %v89, %v216
    %v218 = vpop.f32.mrf.mxu0
    %219 = vmatprep.mubr.bf16.mxu0 0
    %220 = vmatmul.mubr.bf16.gmra.mxu0 %v83
    %v221 = vpop.f32.mrf.mxu0
    %v222 = vadd.f32 %v89, %v221
    %v223 = vpop.f32.mrf.mxu0
    %v224 = vpop.f32.mrf.mxu0
    %v225 = vadd.f32 %v89, %v224
    %v226 = vpop.f32.mrf.mxu0
    %227 = vmatprep.mubr.bf16.mxu0 0
    %228 = vmatmul.mubr.bf16.gmra.mxu0 %v84
    %v229 = vpop.f32.mrf.mxu0
    %v230 = vadd.f32 %v89, %v229
    %v231 = vpop.f32.mrf.mxu0
    %v232 = vpop.f32.mrf.mxu0
    %v233 = vadd.f32 %v89, %v232
    %v234 = vpop.f32.mrf.mxu0
    %235 = vdwg.mxu0
    %s236 = smul.u32 0, 128
    %v237 = vlaneseq
    %v238 = vshrl.u32 %v237, 7
    %v239 = vadd.s32 %v238, 8
    %v240 = vadd.s32 %v238, 16
    %v241 = vadd.s32 %v238, 24
    %v242 = vadd.s32 %v238, 32
    %v243 = vadd.s32 %v238, 40
    %v244 = vadd.s32 %v238, 48
    %v245 = vadd.s32 %v238, 56
    %v246 = vadd.s32 %v238, 64
    %v247 = vadd.s32 %v238, 72
    %v248 = vadd.s32 %v238, 80
    %v249 = vadd.s32 %v238, 88
    %v250 = vadd.s32 %v238, 96
    %v251 = vadd.s32 %v238, 104
    %v252 = vadd.s32 %v238, 112
    %v253 = vadd.s32 %v238, 120
    %v254 = vstv %s236
    %v255 = vadd.s32 %v254, %v238
    %v256 = vadd.s32 %v254, %v239
    %v257 = vadd.s32 %v254, %v240
    %v258 = vadd.s32 %v254, %v241
    %v259 = vadd.s32 %v254, %v242
    %v260 = vadd.s32 %v254, %v243
    %v261 = vadd.s32 %v254, %v244
    %v262 = vadd.s32 %v254, %v245
    %v263 = vadd.s32 %v254, %v246
    %v264 = vadd.s32 %v254, %v247
    %v265 = vadd.s32 %v254, %v248
    %v266 = vadd.s32 %v254, %v249
    %v267 = vadd.s32 %v254, %v250
    %v268 = vadd.s32 %v254, %v251
    %v269 = vadd.s32 %v254, %v252
    %v270 = vadd.s32 %v254, %v253
    %vm271 = vcmp.lt.s32.totalorder %v255, 16
    %vm272 = vcmp.lt.s32.totalorder %v256, 16
    %vm273 = vcmp.lt.s32.totalorder %v257, 16
    %vm274 = vcmp.lt.s32.totalorder %v258, 16
    %vm275 = vcmp.lt.s32.totalorder %v259, 16
    %vm276 = vcmp.lt.s32.totalorder %v260, 16
    %vm277 = vcmp.lt.s32.totalorder %v261, 16
    %vm278 = vcmp.lt.s32.totalorder %v262, 16
    %vm279 = vcmp.lt.s32.totalorder %v263, 16
    %vm280 = vcmp.lt.s32.totalorder %v264, 16
    %vm281 = vcmp.lt.s32.totalorder %v265, 16
    %vm282 = vcmp.lt.s32.totalorder %v266, 16
    %vm283 = vcmp.lt.s32.totalorder %v267, 16
    %vm284 = vcmp.lt.s32.totalorder %v268, 16
    %vm285 = vcmp.lt.s32.totalorder %v269, 16
    %vm286 = vcmp.lt.s32.totalorder %v270, 16
    %v287 = vsel %vm271, 1, 0
    %v288 = vsel %vm272, 1, 0
    %v289 = vsel %vm273, 1, 0
    %v290 = vsel %vm274, 1, 0
    %v291 = vsel %vm275, 1, 0
    %v292 = vsel %vm276, 1, 0
    %v293 = vsel %vm277, 1, 0
    %v294 = vsel %vm278, 1, 0
    %v295 = vsel %vm279, 1, 0
    %v296 = vsel %vm280, 1, 0
    %v297 = vsel %vm281, 1, 0
    %v298 = vsel %vm282, 1, 0
    %v299 = vsel %vm283, 1, 0
    %v300 = vsel %vm284, 1, 0
    %v301 = vsel %vm285, 1, 0
    %v302 = vsel %vm286, 1, 0
    %vm303 = vcmp.eq.s32.totalorder %v287, 1
    %vm304 = vcmp.eq.s32.totalorder %v288, 1
    %vm305 = vcmp.eq.s32.totalorder %v289, 1
    %vm306 = vcmp.eq.s32.totalorder %v290, 1
    %vm307 = vcmp.eq.s32.totalorder %v291, 1
    %vm308 = vcmp.eq.s32.totalorder %v292, 1
    %vm309 = vcmp.eq.s32.totalorder %v293, 1
    %vm310 = vcmp.eq.s32.totalorder %v294, 1
    %vm311 = vcmp.eq.s32.totalorder %v295, 1
    %vm312 = vcmp.eq.s32.totalorder %v296, 1
    %vm313 = vcmp.eq.s32.totalorder %v297, 1
    %vm314 = vcmp.eq.s32.totalorder %v298, 1
    %vm315 = vcmp.eq.s32.totalorder %v299, 1
    %vm316 = vcmp.eq.s32.totalorder %v300, 1
    %vm317 = vcmp.eq.s32.totalorder %v301, 1
    %vm318 = vcmp.eq.s32.totalorder %v302, 1
    %v319 = vsel %vm303, %v174, 0.0
    %v320 = vsel %vm304, %v177, 0.0
    %v321 = vsel %vm305, %v182, 0.0
    %v322 = vsel %vm306, %v185, 0.0
    %v323 = vsel %vm307, %v190, 0.0
    %v324 = vsel %vm308, %v193, 0.0
    %v325 = vsel %vm309, %v198, 0.0
    %v326 = vsel %vm310, %v201, 0.0
    %v327 = vsel %vm311, %v206, 0.0
    %v328 = vsel %vm312, %v209, 0.0
    %v329 = vsel %vm313, %v214, 0.0
    %v330 = vsel %vm314, %v217, 0.0
    %v331 = vsel %vm315, %v222, 0.0
    %v332 = vsel %vm316, %v225, 0.0
    %v333 = vsel %vm317, %v230, 0.0
    %v334 = vsel %vm318, %v233, 0.0
    %335 = vst [vmem:[#allocation7] sm:$0xff] %v319
    %336 = vst [vmem:[#allocation7 + $0x8] sm:$0xff] %v320
    %337 = vst [vmem:[#allocation7 + $0x10] sm:$0xff] %v321
    %338 = vst [vmem:[#allocation7 + $0x18] sm:$0xff] %v322
    %339 = vst [vmem:[#allocation7 + $0x20] sm:$0xff] %v323
    %340 = vst [vmem:[#allocation7 + $0x28] sm:$0xff] %v324
    %341 = vst [vmem:[#allocation7 + $0x30] sm:$0xff] %v325
    %342 = vst [vmem:[#allocation7 + $0x38] sm:$0xff] %v326
    %343 = vst [vmem:[#allocation7 + $0x40] sm:$0xff] %v327
    %344 = vst [vmem:[#allocation7 + $0x48] sm:$0xff] %v328
    %345 = vst [vmem:[#allocation7 + $0x50] sm:$0xff] %v329
    %346 = vst [vmem:[#allocation7 + $0x58] sm:$0xff] %v330
    %347 = vst [vmem:[#allocation7 + $0x60] sm:$0xff] %v331
    %348 = vst [vmem:[#allocation7 + $0x68] sm:$0xff] %v332
    %349 = vst [vmem:[#allocation7 + $0x70] sm:$0xff] %v333
    %350 = vst [vmem:[#allocation7 + $0x78] sm:$0xff] %v334
    // Predicated region
    $region22: #{tpu_custom_call.1} parent=1 // pred_check
      _
    $region23: #{tpu_custom_call.1} parent=1 // pred_check_branch
      %352 = sbr.rel (0) target = $region25
    $region24: #{tpu_custom_call.1} parent=1 // pred_region
      %s354 = ssub.s32 2048, 2048
      %355 = vsyncadd [#allocation4], %s354
      %s356 = sshll.u32 [#allocation7], 4
      %s357 = int_to_ptr.vmem [resolvable:$true] %s356
      %362 = dma.vmem_to_hbm [thread:$0]  %s357, 2048, %s3, [#allocation4], 128, 128, 8
    $region25: #{tpu_custom_call.1} parent=1 // pred_fallthru
      _
    // Predicated region
    $region26: #{tpu_custom_call.1} parent=1 // pred_check
      _
    $region27: #{tpu_custom_call.1} parent=1 // pred_check_branch
      %364 = sbr.rel (0) target = $region29
    $region28: #{tpu_custom_call.1} parent=1 // pred_region
      %365 = dma.done [#allocation4], 2048
    $region29: #{tpu_custom_call.1} parent=1 // pred_fallthru
      _
    %366 = vsyncpa [#allocation3], 1
    %367 = vsyncpa [#allocation6], 1
    %368 = vsyncpa [#allocation4], 1

</llo_original>
